<compile_context>
chip_gen: v7x
topology: tpu7x:2x2x1
jax: 0.10.0
libtpu: 0.0.40
codegen_flags: <defaults>
</compile_context>

<pallas_src>
import functools

import jax
import jax.numpy as jnp
from jax.experimental import pallas as pl
from jax.experimental.pallas import tpu as pltpu

LANE = 128


def _round_up(x: int, m: int) -> int:
    return ((x + m - 1) // m) * m


def _fused_mlp_kernel(x_ref, *rest, n_layers: int, matmul_dtype):
    """Runs the full MLP on one batch tile.

    rest = (w0, b0, w1, b1, ..., w_{L-1}, b_{L-1}, o_ref)
      x_ref: (TM, in_f)   f32          (native feature width, no padding)
      w_i  : (Ki, Ni)     matmul_dtype (internal dims pre-padded to 128 lanes)
      b_i  : (1, Ni)      f32
      o_ref: (TM, out_f)  f32          (native feature width, no padding)
    """
    o_ref = rest[-1]
    h = x_ref[...]                          # activation stays in vregs/VMEM
    for i in range(n_layers):
        w_ref = rest[2 * i]
        b_ref = rest[2 * i + 1]
        y = jnp.dot(h.astype(matmul_dtype), w_ref[...],
                    preferred_element_type=jnp.float32)
        y = y + b_ref[...]                  # f32 bias, broadcast (1,N)->(TM,N)
        if i != n_layers - 1:
            y = jnp.maximum(y, 0.0)         # ReLU after every layer but last
        h = y
    o_ref[...] = h.astype(o_ref.dtype)


def plain_dnn_pallas(x, params, *, tm: int = 1024, matmul_dtype=jnp.float32):
    """Fused forward pass of PlainDNN.

    x: (B, in_features) f32; params: list of (W, b) with W stored as (in, out).
    Returns (B, out_features) f32.
    """
    B, in_f = x.shape
    n_layers = len(params)
    out_f = params[-1][0].shape[1]

    # --- Pad only the INTERNAL hidden dims of the (tiny) weights, once. ---
    # Layer-0 K stays at the native in_f (matches the unpadded x); the last
    # layer's N stays at the native out_f (matches the unpadded output).
    padded = []
    for i, (w, b) in enumerate(params):
        k, n = w.shape
        kp = k if i == 0 else _round_up(k, LANE)
        np_ = n if i == n_layers - 1 else _round_up(n, LANE)
        wp = jnp.zeros((kp, np_), matmul_dtype).at[:k, :n].set(
            w.astype(matmul_dtype))
        bp = jnp.zeros((1, np_), jnp.float32).at[:, :n].set(b)
        padded.append((wp, bp))

    # --- Batch tiling: multiple-of-8 tile, cdiv grid, ragged edge masked. ---
    tm = _round_up(max(int(tm), 8), 8)       # lowering needs tm % 8 == 0
    tm = min(tm, _round_up(B, 8))            # don't exceed the batch
    # Give the "parallel" grid >= 2 steps when the batch allows, so a v7x
    # megacore can split steps across its two TensorCores (no-op on v5e/v6e).
    if pl.cdiv(B, tm) < 2 and B > 8:
        tm = _round_up(pl.cdiv(B, 2), 8)
    grid = (pl.cdiv(B, tm),)

    in_specs = [pl.BlockSpec((tm, in_f), lambda i: (i, 0))]
    flat_wb = []
    for (wp, bp) in padded:
        kp, np_ = wp.shape
        # Constant block index -> Pallas keeps these VMEM-resident across grid
        # steps (no re-DMA).  pl.Buffered(1) would also drop the redundant
        # second buffer (~150 KiB total) but is skipped for lowering safety.
        in_specs.append(pl.BlockSpec((kp, np_), lambda i: (0, 0)))
        in_specs.append(pl.BlockSpec((1, np_), lambda i: (0, 0)))
        flat_wb.extend([wp, bp])

    return pl.pallas_call(
        functools.partial(_fused_mlp_kernel,
                          n_layers=n_layers, matmul_dtype=matmul_dtype),
        out_shape=jax.ShapeDtypeStruct((B, out_f), jnp.float32),
        grid_spec=pltpu.PrefetchScalarGridSpec(
            num_scalar_prefetch=0,
            grid=grid,
            in_specs=in_specs,
            out_specs=pl.BlockSpec((tm, out_f), lambda i: (i, 0)),
        ),
        compiler_params=pltpu.CompilerParams(
            dimension_semantics=("parallel",)),
    )(x, *flat_wb)


def init_plain_dnn_params(key, in_features: int, out_features: int,
                          n_plain_block: int):
    """Deterministic synthetic init mirroring the module's layer shapes.

    Returns a list of (W, b) with W stored as (in, out) -- i.e. pre-transposed
    relative to PyTorch so the kernel computes y = x @ W + b."""
    dims = [(in_features, in_features)] * n_plain_block
    dims += [(in_features, 64), (64, out_features)]
    params = []
    for (fan_in, fan_out) in dims:
        key, kw, kb = jax.random.split(key, 3)
        scale = 1.0 / jnp.sqrt(jnp.float32(fan_in))
        w = jax.random.uniform(kw, (fan_in, fan_out), jnp.float32,
                               minval=-scale, maxval=scale)
        b = jax.random.uniform(kb, (fan_out,), jnp.float32,
                               minval=-scale, maxval=scale)
        params.append((w, b))
    return params


def plain_dnn_reference(x, params):
    """Pure-JAX f32 reference."""
    h = x
    n_layers = len(params)
    for i, (w, b) in enumerate(params):
        h = h @ w + b
        if i != n_layers - 1:
            h = jnp.maximum(h, 0.0)
    return h


if __name__ == "__main__":
    in_features = 32
    out_features = 8
    n_plain_block = 2

    key = jax.random.PRNGKey(0)
    key, kx, kx2 = jax.random.split(key, 3)
    params = init_plain_dnn_params(key, in_features, out_features,
                                   n_plain_block)

    # --- Primary small-shape test (batch=2, matching the module spec). ---
    x = jax.random.normal(kx, (2, in_features), dtype=jnp.float32)
    fwd = jax.jit(lambda xx: plain_dnn_pallas(xx, params))
    out = jax.block_until_ready(fwd(x))
    ref = plain_dnn_reference(x, params)
    assert out.shape == (2, out_features)
    assert jnp.allclose(out, ref, atol=5e-3, rtol=5e-3), \
        float(jnp.max(jnp.abs(out - ref)))

    # --- Secondary test: multi-step grid + ragged (masked) edge block. ---
    x2 = jax.random.normal(kx2, (50, in_features), dtype=jnp.float32)
    out2 = jax.block_until_ready(plain_dnn_pallas(x2, params, tm=16))
    ref2 = plain_dnn_reference(x2, params)
    assert out2.shape == (50, out_features)
    assert jnp.allclose(out2, ref2, atol=5e-3, rtol=5e-3), \
        float(jnp.max(jnp.abs(out2 - ref2)))

    print("KERNEL_OK")
</pallas_src>

<mosaic_0001>
module attributes {stable_mosaic.version = 11 : i64} {
  func.func @_fused_mlp_kernel(%arg0: i32, %arg1: memref<8x32xf32, #tpu.memory_space<vmem>>, %arg2: memref<32x128xf32, #tpu.memory_space<vmem>>, %arg3: memref<1x128xf32, #tpu.memory_space<vmem>>, %arg4: memref<128x128xf32, #tpu.memory_space<vmem>>, %arg5: memref<1x128xf32, #tpu.memory_space<vmem>>, %arg6: memref<128x128xf32, #tpu.memory_space<vmem>>, %arg7: memref<1x128xf32, #tpu.memory_space<vmem>>, %arg8: memref<128x8xf32, #tpu.memory_space<vmem>>, %arg9: memref<1x8xf32, #tpu.memory_space<vmem>>, %arg10: memref<8x8xf32, #tpu.memory_space<vmem>>) attributes {dimension_semantics = [#tpu.dimension_semantics<parallel>], iteration_bounds = array<i64: 1>, scalar_prefetch = 0 : i64, scratch_operands = 0 : i64, tpu.core_type = #tpu.core_type<tc>, window_params = [{transform_indices = @transform_0, window_bounds = array<i64: 8, 32>}, {pipeline_mode = #tpu.pipeline_mode<synchronous>, transform_indices = @transform_1, window_bounds = array<i64: 32, 128>}, {pipeline_mode = #tpu.pipeline_mode<synchronous>, transform_indices = @transform_2, window_bounds = array<i64: 1, 128>}, {pipeline_mode = #tpu.pipeline_mode<synchronous>, transform_indices = @transform_3, window_bounds = array<i64: 128, 128>}, {pipeline_mode = #tpu.pipeline_mode<synchronous>, transform_indices = @transform_4, window_bounds = array<i64: 1, 128>}, {pipeline_mode = #tpu.pipeline_mode<synchronous>, transform_indices = @transform_5, window_bounds = array<i64: 128, 128>}, {pipeline_mode = #tpu.pipeline_mode<synchronous>, transform_indices = @transform_6, window_bounds = array<i64: 1, 128>}, {pipeline_mode = #tpu.pipeline_mode<synchronous>, transform_indices = @transform_7, window_bounds = array<i64: 128, 8>}, {pipeline_mode = #tpu.pipeline_mode<synchronous>, transform_indices = @transform_8, window_bounds = array<i64: 1, 8>}, {transform_indices = @transform_9, window_bounds = array<i64: 8, 8>}]} {
    %c0 = arith.constant 0 : index
    %c0_0 = arith.constant 0 : index
    %0 = vector.load %arg1[%c0, %c0_0] : memref<8x32xf32, #tpu.memory_space<vmem>>, vector<8x32xf32>
    %c0_1 = arith.constant 0 : index
    %c0_2 = arith.constant 0 : index
    %1 = vector.load %arg2[%c0_1, %c0_2] : memref<32x128xf32, #tpu.memory_space<vmem>>, vector<32x128xf32>
    %cst = arith.constant dense<0.000000e+00> : vector<8x128xf32>
    %2 = tpu.matmul %0, %1, %cst {dimension_numbers = #tpu.dot_dimension_numbers<[1], [0], [0], [1], [0, 0, 1, 1], [], []>} : vector<8x32xf32>, vector<32x128xf32>, vector<8x128xf32> -> vector<8x128xf32>
    %c0_3 = arith.constant 0 : index
    %c0_4 = arith.constant 0 : index
    %3 = vector.load %arg3[%c0_3, %c0_4] : memref<1x128xf32, #tpu.memory_space<vmem>>, vector<1x128xf32>
    %4 = vector.broadcast %3 : vector<1x128xf32> to vector<8x128xf32>
    %5 = arith.addf %2, %4 : vector<8x128xf32>
    %cst_5 = arith.constant 0.000000e+00 : f32
    %6 = vector.broadcast %cst_5 : f32 to vector<8x128xf32>
    %7 = arith.maximumf %5, %6 : vector<8x128xf32>
    %c0_6 = arith.constant 0 : index
    %c0_7 = arith.constant 0 : index
    %8 = vector.load %arg4[%c0_6, %c0_7] : memref<128x128xf32, #tpu.memory_space<vmem>>, vector<128x128xf32>
    %cst_8 = arith.constant dense<0.000000e+00> : vector<8x128xf32>
    %9 = tpu.matmul %7, %8, %cst_8 {dimension_numbers = #tpu.dot_dimension_numbers<[1], [0], [0], [1], [0, 0, 1, 1], [], []>} : vector<8x128xf32>, vector<128x128xf32>, vector<8x128xf32> -> vector<8x128xf32>
    %c0_9 = arith.constant 0 : index
    %c0_10 = arith.constant 0 : index
    %10 = vector.load %arg5[%c0_9, %c0_10] : memref<1x128xf32, #tpu.memory_space<vmem>>, vector<1x128xf32>
    %11 = vector.broadcast %10 : vector<1x128xf32> to vector<8x128xf32>
    %12 = arith.addf %9, %11 : vector<8x128xf32>
    %cst_11 = arith.constant 0.000000e+00 : f32
    %13 = vector.broadcast %cst_11 : f32 to vector<8x128xf32>
    %14 = arith.maximumf %12, %13 : vector<8x128xf32>
    %c0_12 = arith.constant 0 : index
    %c0_13 = arith.constant 0 : index
    %15 = vector.load %arg6[%c0_12, %c0_13] : memref<128x128xf32, #tpu.memory_space<vmem>>, vector<128x128xf32>
    %cst_14 = arith.constant dense<0.000000e+00> : vector<8x128xf32>
    %16 = tpu.matmul %14, %15, %cst_14 {dimension_numbers = #tpu.dot_dimension_numbers<[1], [0], [0], [1], [0, 0, 1, 1], [], []>} : vector<8x128xf32>, vector<128x128xf32>, vector<8x128xf32> -> vector<8x128xf32>
    %c0_15 = arith.constant 0 : index
    %c0_16 = arith.constant 0 : index
    %17 = vector.load %arg7[%c0_15, %c0_16] : memref<1x128xf32, #tpu.memory_space<vmem>>, vector<1x128xf32>
    %18 = vector.broadcast %17 : vector<1x128xf32> to vector<8x128xf32>
    %19 = arith.addf %16, %18 : vector<8x128xf32>
    %cst_17 = arith.constant 0.000000e+00 : f32
    %20 = vector.broadcast %cst_17 : f32 to vector<8x128xf32>
    %21 = arith.maximumf %19, %20 : vector<8x128xf32>
    %c0_18 = arith.constant 0 : index
    %c0_19 = arith.constant 0 : index
    %22 = vector.load %arg8[%c0_18, %c0_19] : memref<128x8xf32, #tpu.memory_space<vmem>>, vector<128x8xf32>
    %cst_20 = arith.constant dense<0.000000e+00> : vector<8x8xf32>
    %23 = tpu.matmul %21, %22, %cst_20 {dimension_numbers = #tpu.dot_dimension_numbers<[1], [0], [0], [1], [0, 0, 1, 1], [], []>} : vector<8x128xf32>, vector<128x8xf32>, vector<8x8xf32> -> vector<8x8xf32>
    %c0_21 = arith.constant 0 : index
    %c0_22 = arith.constant 0 : index
    %24 = vector.load %arg9[%c0_21, %c0_22] : memref<1x8xf32, #tpu.memory_space<vmem>>, vector<1x8xf32>
    %25 = vector.broadcast %24 : vector<1x8xf32> to vector<8x8xf32>
    %26 = arith.addf %23, %25 : vector<8x8xf32>
    %c0_23 = arith.constant 0 : index
    %c0_24 = arith.constant 0 : index
    %27 = vector.load %arg10[%c0_23, %c0_24] : memref<8x8xf32, #tpu.memory_space<vmem>>, vector<8x8xf32>
    tpu.vector_store %arg10[%c0_23, %c0_24], %26 {strides = array<i32>} : memref<8x8xf32, #tpu.memory_space<vmem>>, vector<8x8xf32>,
    return
  }
  func.func @transform_0(%arg0: i32) -> (i32, i32) {
    %c0_i32 = arith.constant 0 : i32
    %c0_i32_0 = arith.constant 0 : i32
    return %arg0, %c0_i32 : i32, i32
  }
  func.func @transform_1(%arg0: i32) -> (i32, i32) {
    %c0_i32 = arith.constant 0 : i32
    %c0_i32_0 = arith.constant 0 : i32
    %c0_i32_1 = arith.constant 0 : i32
    return %c0_i32, %c0_i32_0 : i32, i32
  }
  func.func @transform_2(%arg0: i32) -> (i32, i32) {
    %c0_i32 = arith.constant 0 : i32
    %c0_i32_0 = arith.constant 0 : i32
    %c0_i32_1 = arith.constant 0 : i32
    return %c0_i32, %c0_i32_0 : i32, i32
  }
  func.func @transform_3(%arg0: i32) -> (i32, i32) {
    %c0_i32 = arith.constant 0 : i32
    %c0_i32_0 = arith.constant 0 : i32
    %c0_i32_1 = arith.constant 0 : i32
    return %c0_i32, %c0_i32_0 : i32, i32
  }
  func.func @transform_4(%arg0: i32) -> (i32, i32) {
    %c0_i32 = arith.constant 0 : i32
    %c0_i32_0 = arith.constant 0 : i32
    %c0_i32_1 = arith.constant 0 : i32
    return %c0_i32, %c0_i32_0 : i32, i32
  }
  func.func @transform_5(%arg0: i32) -> (i32, i32) {
    %c0_i32 = arith.constant 0 : i32
    %c0_i32_0 = arith.constant 0 : i32
    %c0_i32_1 = arith.constant 0 : i32
    return %c0_i32, %c0_i32_0 : i32, i32
  }
  func.func @transform_6(%arg0: i32) -> (i32, i32) {
    %c0_i32 = arith.constant 0 : i32
    %c0_i32_0 = arith.constant 0 : i32
    %c0_i32_1 = arith.constant 0 : i32
    return %c0_i32, %c0_i32_0 : i32, i32
  }
  func.func @transform_7(%arg0: i32) -> (i32, i32) {
    %c0_i32 = arith.constant 0 : i32
    %c0_i32_0 = arith.constant 0 : i32
    %c0_i32_1 = arith.constant 0 : i32
    return %c0_i32, %c0_i32_0 : i32, i32
  }
  func.func @transform_8(%arg0: i32) -> (i32, i32) {
    %c0_i32 = arith.constant 0 : i32
    %c0_i32_0 = arith.constant 0 : i32
    %c0_i32_1 = arith.constant 0 : i32
    return %c0_i32, %c0_i32_0 : i32, i32
  }
  func.func @transform_9(%arg0: i32) -> (i32, i32) {
    %c0_i32 = arith.constant 0 : i32
    %c0_i32_0 = arith.constant 0 : i32
    return %arg0, %c0_i32 : i32, i32
  }
}

</mosaic_0001>

<llo_original>
// kernel: _lambda_.1
$region0: #{_lambda_.1}
  #allocation0 [shape = 'u32[]', space=smem, size = 0x4, offset = 0x4, fixed_abs, tag = 'smem constant byte address 0x4 - core index']
  #allocation1 [shape = 'u32[144,128]{1,0:T(1,128)}', space=vmem, size = 0x12000, scoped, tag = 'internal scratch']
  %s0 = inlined_call_operand.vmem [shape: f32[2,32], index: 0, kind: input, shape index: {}]
  %s1 = inlined_call_operand.vmem [shape: f32[32,128], index: 1, kind: input, shape index: {}]
  %s2 = inlined_call_operand.vmem [shape: f32[1,128], index: 2, kind: input, shape index: {}]
  %s3 = inlined_call_operand.vmem [shape: f32[128,128], index: 3, kind: input, shape index: {}]
  %s4 = inlined_call_operand.vmem [shape: f32[1,128], index: 4, kind: input, shape index: {}]
  %s5 = inlined_call_operand.hbm [shape: f32[128,128], index: 5, kind: input, shape index: {}]
  %s6 = inlined_call_operand.vmem [shape: f32[1,128], index: 6, kind: input, shape index: {}]
  %s7 = inlined_call_operand.hbm [shape: f32[128,8], index: 7, kind: input, shape index: {}]
  %s8 = inlined_call_operand.vmem [shape: f32[1,8], index: 8, kind: input, shape index: {}]
  %s9 = inlined_call_operand.hbm [shape: f32[2,8], index: 9, kind: output, shape index: {}]
  %s10 = sld [smem:[#allocation0]]
  $region54: #{_lambda_.1} parent=0
    _
  %s12 = ssub.s32 1, %s10
  %s13 = scalar_select 0, %s12, %s10
  $region1: #{_lambda_.1} parent=0
    #allocation2 [shape = 'u8[65536]{0}', space=vmem, size = 0x10000, scoped, tag = 'input window, operand 5, single buffered']
    #allocation3 [shape = 's32[1]{0}', space=sflag, size = 0x4, scoped, tag = 'scoped memory for _lambda_.1']
    #allocation4 [shape = 's32[1]{0}', space=sflag, size = 0x4, scoped, tag = 'scoped memory for _lambda_.1']
    #allocation5 [shape = 'u8[65536]{0}', space=vmem, size = 0x10000, scoped, tag = 'input window, operand 7, single buffered']
    #allocation6 [shape = 's32[1]{0}', space=sflag, size = 0x4, scoped, tag = 'scoped memory for _lambda_.1']
    #allocation7 [shape = 'u8[4096]{0}', space=vmem, size = 0x1000, scoped, tag = 'output window, operand 0, single buffered']
    %14 = vsyncpa [#allocation3], 0
    %15 = vsyncpa [#allocation6], 0
    %16 = vsyncpa [#allocation4], 0
    // Predicated region
    $region2: #{_lambda_.1} parent=1 // pred_check
      _
    $region3: #{_lambda_.1} parent=1 // pred_check_branch
      %18 = sbr.rel (0) target = $region5
    $region4: #{_lambda_.1} parent=1 // pred_region
      _
    $region5: #{_lambda_.1} parent=1 // pred_fallthru
      _
    // Predicated region
    $region6: #{_lambda_.1} parent=1 // pred_check
      _
    $region7: #{_lambda_.1} parent=1 // pred_check_branch
      %20 = sbr.rel (0) target = $region9
    $region8: #{_lambda_.1} parent=1 // pred_region
      _
    $region9: #{_lambda_.1} parent=1 // pred_fallthru
      _
    // Predicated region
    $region10: #{_lambda_.1} parent=1 // pred_check
      _
    $region11: #{_lambda_.1} parent=1 // pred_check_branch
      %22 = sbr.rel (0) target = $region13
    $region12: #{_lambda_.1} parent=1 // pred_region
      _
    $region13: #{_lambda_.1} parent=1 // pred_fallthru
      _
    // Predicated region
    $region14: #{_lambda_.1} parent=1 // pred_check
      _
    $region15: #{_lambda_.1} parent=1 // pred_check_branch
      %24 = sbr.rel (0) target = $region17
    $region16: #{_lambda_.1} parent=1 // pred_region
      _
    $region17: #{_lambda_.1} parent=1 // pred_fallthru
      _
    // Predicated region
    $region18: #{_lambda_.1} parent=1 // pred_check
      _
    $region19: #{_lambda_.1} parent=1 // pred_check_branch
      %26 = sbr.rel (0) target = $region21
    $region20: #{_lambda_.1} parent=1 // pred_region
      _
    $region21: #{_lambda_.1} parent=1 // pred_fallthru
      _
    // Predicated region
    $region22: #{_lambda_.1} parent=1 // pred_check
      _
    $region23: #{_lambda_.1} parent=1 // pred_check_branch
      %28 = sbr.rel (0) target = $region25
    $region24: #{_lambda_.1} parent=1 // pred_region
      %s30 = ssub.s32 2048, 2048
      %31 = vsyncadd [#allocation3], %s30
      %s32 = sshll.u32 [#allocation2], 4
      %s33 = int_to_ptr.vmem [resolvable:$true] %s32
      %38 = dma.hbm_to_vmem [thread:$0]  %s5, 2048, %s33, [#allocation3], 128, 128, 8
    $region25: #{_lambda_.1} parent=1 // pred_fallthru
      _
    // Predicated region
    $region26: #{_lambda_.1} parent=1 // pred_check
      _
    $region27: #{_lambda_.1} parent=1 // pred_check_branch
      %40 = sbr.rel (0) target = $region29
    $region28: #{_lambda_.1} parent=1 // pred_region
      _
    $region29: #{_lambda_.1} parent=1 // pred_fallthru
      _
    // Predicated region
    $region30: #{_lambda_.1} parent=1 // pred_check
      _
    $region31: #{_lambda_.1} parent=1 // pred_check_branch
      %42 = sbr.rel (0) target = $region33
    $region32: #{_lambda_.1} parent=1 // pred_region
      %s44 = ssub.s32 2048, 2048
      %45 = vsyncadd [#allocation6], %s44
      %s46 = sshll.u32 [#allocation5], 4
      %s47 = int_to_ptr.vmem [resolvable:$true] %s46
      %52 = dma.hbm_to_vmem [thread:$0]  %s7, 2048, %s47, [#allocation6], 128, 128, 8
    $region33: #{_lambda_.1} parent=1 // pred_fallthru
      _
    // Predicated region
    $region34: #{_lambda_.1} parent=1 // pred_check
      _
    $region35: #{_lambda_.1} parent=1 // pred_check_branch
      %54 = sbr.rel (0) target = $region37
    $region36: #{_lambda_.1} parent=1 // pred_region
      _
    $region37: #{_lambda_.1} parent=1 // pred_fallthru
      _
    // Predicated region
    $region38: #{_lambda_.1} parent=1 // pred_check
      _
    $region39: #{_lambda_.1} parent=1 // pred_check_branch
      %56 = sbr.rel (0) target = $region41
    $region40: #{_lambda_.1} parent=1 // pred_region
      %57 = dma.done [#allocation3], 2048
    $region41: #{_lambda_.1} parent=1 // pred_fallthru
      _
    // Predicated region
    $region42: #{_lambda_.1} parent=1 // pred_check
      _
    $region43: #{_lambda_.1} parent=1 // pred_check_branch
      %59 = sbr.rel (0) target = $region45
    $region44: #{_lambda_.1} parent=1 // pred_region
      %60 = dma.done [#allocation6], 2048
    $region45: #{_lambda_.1} parent=1 // pred_fallthru
      _
    %v61 = vld [vmem:[%s0] sm:$0xff]
    %v62 = vld [vmem:[%s1] sm:$0xff]
    %v63 = vld [vmem:[%s1 + $0x8] sm:$0xff]
    %v64 = vld [vmem:[%s1 + $0x10] sm:$0xff]
    %v65 = vld [vmem:[%s1 + $0x18] sm:$0xff]
    %v66 = vld [vmem:[%s2] sm:$0x1]
    %v68 = vlaneseq
    %v69 = vshrl.u32 %v68, 7
    %v70 = vsub.s32 0, %v69
    %v71 = vrot.slane %v66, %v70
    %vm73 = vcmask 261120
    %v75 = vsel %vm73, %v61, 0
    %77 = vmatprep.subr.mxu0 0.0
    %78 = vmatpush1.msra.mxu0 %v62
    %79 = vmatprep.subr.mxu0 0.0
    %80 = vmatpush1.msra.mxu0 %v63
    %81 = vmatprep.subr.mxu0 0.0
    %82 = vmatpush1.msra.mxu0 %v64
    %83 = vmatprep.subr.mxu0 0.0
    %84 = vmatpush1.msra.mxu0 %v65
    %85 = vmatprep.subr.mxu0 0.0
    %86 = vmatpush1.msra.mxu0 0.0
    %87 = vmatprep.subr.mxu0 0.0
    %88 = vmatpush1.msra.mxu0 0.0
    %89 = vmatprep.subr.mxu0 0.0
    %90 = vmatpush1.msra.mxu0 0.0
    %91 = vmatprep.subr.mxu0 0.0
    %92 = vmatpush1.msra.mxu0 0.0
    %93 = vmatprep.subr.mxu0 0.0
    %94 = vmatpush1.msra.mxu0 0.0
    %95 = vmatprep.subr.mxu0 0.0
    %96 = vmatpush1.msra.mxu0 0.0
    %97 = vmatprep.subr.mxu0 0.0
    %98 = vmatpush1.msra.mxu0 0.0
    %99 = vmatprep.subr.mxu0 0.0
    %100 = vmatpush1.msra.mxu0 0.0
    %101 = vmatprep.subr.mxu0 0.0
    %102 = vmatpush1.msra.mxu0 0.0
    %103 = vmatprep.subr.mxu0 0.0
    %104 = vmatpush1.msra.mxu0 0.0
    %105 = vmatprep.subr.mxu0 0.0
    %106 = vmatpush1.msra.mxu0 0.0
    %107 = vmatprep.subr.mxu0 0.0
    %108 = vmatpush1.msra.mxu0 0.0
    %109 = vmatprep.subr.mxu0 0.0
    %110 = vmatpush1.msra.mxu0 0.0
    %111 = vmatprep.subr.mxu0 0.0
    %112 = vmatpush1.msra.mxu0 0.0
    %113 = vmatprep.subr.mxu0 0.0
    %114 = vmatpush1.msra.mxu0 0.0
    %115 = vmatprep.subr.mxu0 0.0
    %116 = vmatpush1.msra.mxu0 0.0
    %117 = vmatprep.subr.mxu0 0.0
    %118 = vmatpush1.msra.mxu0 0.0
    %119 = vmatprep.subr.mxu0 0.0
    %120 = vmatpush1.msra.mxu0 0.0
    %121 = vmatprep.subr.mxu0 0.0
    %122 = vmatpush1.msra.mxu0 0.0
    %123 = vmatprep.subr.mxu0 0.0
    %124 = vmatpush1.msra.mxu0 0.0
    %125 = vmatprep.subr.mxu0 0.0
    %126 = vmatpush1.msra.mxu0 0.0
    %127 = vmatprep.subr.mxu0 0.0
    %128 = vmatpush1.msra.mxu0 0.0
    %129 = vmatprep.subr.mxu0 0.0
    %130 = vmatpush1.msra.mxu0 0.0
    %131 = vmatprep.subr.mxu0 0.0
    %132 = vmatpush1.msra.mxu0 0.0
    %133 = vmatprep.subr.mxu0 0.0
    %134 = vmatpush1.msra.mxu0 0.0
    %135 = vmatprep.subr.mxu0 0.0
    %136 = vmatpush1.msra.mxu0 0.0
    %137 = vmatprep.subr.mxu0 0.0
    %138 = vmatpush1.msra.mxu0 0.0
    %139 = vmatprep.subr.mxu0 0.0
    %140 = vmatpush1.msra.mxu0 0.0
    %141 = vmatprep.mubr.f32.mxu0 0.0
    %142 = vmatmul.mubr.f32.gmra.mrb[0].mxu0 %v75
    %v143 = vpop.f32.mrb[0].mxu0
    %v144 = vadd.f32 %v71, %v143
    %v145 = vpop.f32.mrb[0].mxu0
    %146 = vdwg.mxu0
    %v147 = vmax.f32 %v144, 0.0
    %v148 = vld [vmem:[%s3] sm:$0xff]
    %v149 = vld [vmem:[%s3 + $0x8] sm:$0xff]
    %v150 = vld [vmem:[%s3 + $0x10] sm:$0xff]
    %v151 = vld [vmem:[%s3 + $0x18] sm:$0xff]
    %v152 = vld [vmem:[%s3 + $0x20] sm:$0xff]
    %v153 = vld [vmem:[%s3 + $0x28] sm:$0xff]
    %v154 = vld [vmem:[%s3 + $0x30] sm:$0xff]
    %v155 = vld [vmem:[%s3 + $0x38] sm:$0xff]
    %v156 = vld [vmem:[%s3 + $0x40] sm:$0xff]
    %v157 = vld [vmem:[%s3 + $0x48] sm:$0xff]
    %v158 = vld [vmem:[%s3 + $0x50] sm:$0xff]
    %v159 = vld [vmem:[%s3 + $0x58] sm:$0xff]
    %v160 = vld [vmem:[%s3 + $0x60] sm:$0xff]
    %v161 = vld [vmem:[%s3 + $0x68] sm:$0xff]
    %v162 = vld [vmem:[%s3 + $0x70] sm:$0xff]
    %v163 = vld [vmem:[%s3 + $0x78] sm:$0xff]
    %v164 = vld [vmem:[%s4] sm:$0x1]
    %v166 = vlaneseq
    %v167 = vshrl.u32 %v166, 7
    %v168 = vsub.s32 0, %v167
    %v169 = vrot.slane %v164, %v168
    %171 = vmatprep.subr.mxu0 0.0
    %172 = vmatpush1.msra.mxu0 %v148
    %173 = vmatprep.subr.mxu0 0.0
    %174 = vmatpush1.msra.mxu0 %v149
    %175 = vmatprep.subr.mxu0 0.0
    %176 = vmatpush1.msra.mxu0 %v150
    %177 = vmatprep.subr.mxu0 0.0
    %178 = vmatpush1.msra.mxu0 %v151
    %179 = vmatprep.subr.mxu0 0.0
    %180 = vmatpush1.msra.mxu0 %v152
    %181 = vmatprep.subr.mxu0 0.0
    %182 = vmatpush1.msra.mxu0 %v153
    %183 = vmatprep.subr.mxu0 0.0
    %184 = vmatpush1.msra.mxu0 %v154
    %185 = vmatprep.subr.mxu0 0.0
    %186 = vmatpush1.msra.mxu0 %v155
    %187 = vmatprep.subr.mxu0 0.0
    %188 = vmatpush1.msra.mxu0 %v156
    %189 = vmatprep.subr.mxu0 0.0
    %190 = vmatpush1.msra.mxu0 %v157
    %191 = vmatprep.subr.mxu0 0.0
    %192 = vmatpush1.msra.mxu0 %v158
    %193 = vmatprep.subr.mxu0 0.0
    %194 = vmatpush1.msra.mxu0 %v159
    %195 = vmatprep.subr.mxu0 0.0
    %196 = vmatpush1.msra.mxu0 %v160
    %197 = vmatprep.subr.mxu0 0.0
    %198 = vmatpush1.msra.mxu0 %v161
    %199 = vmatprep.subr.mxu0 0.0
    %200 = vmatpush1.msra.mxu0 %v162
    %201 = vmatprep.subr.mxu0 0.0
    %202 = vmatpush1.msra.mxu0 %v163
    %203 = vmatprep.subr.mxu0 0.0
    %204 = vmatpush1.msra.mxu0 0.0
    %205 = vmatprep.subr.mxu0 0.0
    %206 = vmatpush1.msra.mxu0 0.0
    %207 = vmatprep.subr.mxu0 0.0
    %208 = vmatpush1.msra.mxu0 0.0
    %209 = vmatprep.subr.mxu0 0.0
    %210 = vmatpush1.msra.mxu0 0.0
    %211 = vmatprep.subr.mxu0 0.0
    %212 = vmatpush1.msra.mxu0 0.0
    %213 = vmatprep.subr.mxu0 0.0
    %214 = vmatpush1.msra.mxu0 0.0
    %215 = vmatprep.subr.mxu0 0.0
    %216 = vmatpush1.msra.mxu0 0.0
    %217 = vmatprep.subr.mxu0 0.0
    %218 = vmatpush1.msra.mxu0 0.0
    %219 = vmatprep.subr.mxu0 0.0
    %220 = vmatpush1.msra.mxu0 0.0
    %221 = vmatprep.subr.mxu0 0.0
    %222 = vmatpush1.msra.mxu0 0.0
    %223 = vmatprep.subr.mxu0 0.0
    %224 = vmatpush1.msra.mxu0 0.0
    %225 = vmatprep.subr.mxu0 0.0
    %226 = vmatpush1.msra.mxu0 0.0
    %227 = vmatprep.subr.mxu0 0.0
    %228 = vmatpush1.msra.mxu0 0.0
    %229 = vmatprep.subr.mxu0 0.0
    %230 = vmatpush1.msra.mxu0 0.0
    %231 = vmatprep.subr.mxu0 0.0
    %232 = vmatpush1.msra.mxu0 0.0
    %233 = vmatprep.subr.mxu0 0.0
    %234 = vmatpush1.msra.mxu0 0.0
    %235 = vmatprep.mubr.f32.mxu0 0.0
    %236 = vmatmul.mubr.f32.gmra.mrb[0].mxu0 %v147
    %v237 = vpop.f32.mrb[0].mxu0
    %v238 = vadd.f32 %v169, %v237
    %v239 = vpop.f32.mrb[0].mxu0
    %240 = vdwg.mxu0
    %v241 = vmax.f32 %v238, 0.0
    %v242 = vld [vmem:[#allocation2] sm:$0xff]
    %v243 = vld [vmem:[#allocation2 + $0x8] sm:$0xff]
    %v244 = vld [vmem:[#allocation2 + $0x10] sm:$0xff]
    %v245 = vld [vmem:[#allocation2 + $0x18] sm:$0xff]
    %v246 = vld [vmem:[#allocation2 + $0x20] sm:$0xff]
    %v247 = vld [vmem:[#allocation2 + $0x28] sm:$0xff]
    %v248 = vld [vmem:[#allocation2 + $0x30] sm:$0xff]
    %v249 = vld [vmem:[#allocation2 + $0x38] sm:$0xff]
    %v250 = vld [vmem:[#allocation2 + $0x40] sm:$0xff]
    %v251 = vld [vmem:[#allocation2 + $0x48] sm:$0xff]
    %v252 = vld [vmem:[#allocation2 + $0x50] sm:$0xff]
    %v253 = vld [vmem:[#allocation2 + $0x58] sm:$0xff]
    %v254 = vld [vmem:[#allocation2 + $0x60] sm:$0xff]
    %v255 = vld [vmem:[#allocation2 + $0x68] sm:$0xff]
    %v256 = vld [vmem:[#allocation2 + $0x70] sm:$0xff]
    %v257 = vld [vmem:[#allocation2 + $0x78] sm:$0xff]
    %v258 = vld [vmem:[%s6] sm:$0x1]
    %v260 = vlaneseq
    %v261 = vshrl.u32 %v260, 7
    %v262 = vsub.s32 0, %v261
    %v263 = vrot.slane %v258, %v262
    %265 = vmatprep.subr.mxu0 0.0
    %266 = vmatpush1.msra.mxu0 %v242
    %267 = vmatprep.subr.mxu0 0.0
    %268 = vmatpush1.msra.mxu0 %v243
    %269 = vmatprep.subr.mxu0 0.0
    %270 = vmatpush1.msra.mxu0 %v244
    %271 = vmatprep.subr.mxu0 0.0
    %272 = vmatpush1.msra.mxu0 %v245
    %273 = vmatprep.subr.mxu0 0.0
    %274 = vmatpush1.msra.mxu0 %v246
    %275 = vmatprep.subr.mxu0 0.0
    %276 = vmatpush1.msra.mxu0 %v247
    %277 = vmatprep.subr.mxu0 0.0
    %278 = vmatpush1.msra.mxu0 %v248
    %279 = vmatprep.subr.mxu0 0.0
    %280 = vmatpush1.msra.mxu0 %v249
    %281 = vmatprep.subr.mxu0 0.0
    %282 = vmatpush1.msra.mxu0 %v250
    %283 = vmatprep.subr.mxu0 0.0
    %284 = vmatpush1.msra.mxu0 %v251
    %285 = vmatprep.subr.mxu0 0.0
    %286 = vmatpush1.msra.mxu0 %v252
    %287 = vmatprep.subr.mxu0 0.0
    %288 = vmatpush1.msra.mxu0 %v253
    %289 = vmatprep.subr.mxu0 0.0
    %290 = vmatpush1.msra.mxu0 %v254
    %291 = vmatprep.subr.mxu0 0.0
    %292 = vmatpush1.msra.mxu0 %v255
    %293 = vmatprep.subr.mxu0 0.0
    %294 = vmatpush1.msra.mxu0 %v256
    %295 = vmatprep.subr.mxu0 0.0
    %296 = vmatpush1.msra.mxu0 %v257
    %297 = vmatprep.subr.mxu0 0.0
    %298 = vmatpush1.msra.mxu0 0.0
    %299 = vmatprep.subr.mxu0 0.0
    %300 = vmatpush1.msra.mxu0 0.0
    %301 = vmatprep.subr.mxu0 0.0
    %302 = vmatpush1.msra.mxu0 0.0
    %303 = vmatprep.subr.mxu0 0.0
    %304 = vmatpush1.msra.mxu0 0.0
    %305 = vmatprep.subr.mxu0 0.0
    %306 = vmatpush1.msra.mxu0 0.0
    %307 = vmatprep.subr.mxu0 0.0
    %308 = vmatpush1.msra.mxu0 0.0
    %309 = vmatprep.subr.mxu0 0.0
    %310 = vmatpush1.msra.mxu0 0.0
    %311 = vmatprep.subr.mxu0 0.0
    %312 = vmatpush1.msra.mxu0 0.0
    %313 = vmatprep.subr.mxu0 0.0
    %314 = vmatpush1.msra.mxu0 0.0
    %315 = vmatprep.subr.mxu0 0.0
    %316 = vmatpush1.msra.mxu0 0.0
    %317 = vmatprep.subr.mxu0 0.0
    %318 = vmatpush1.msra.mxu0 0.0
    %319 = vmatprep.subr.mxu0 0.0
    %320 = vmatpush1.msra.mxu0 0.0
    %321 = vmatprep.subr.mxu0 0.0
    %322 = vmatpush1.msra.mxu0 0.0
    %323 = vmatprep.subr.mxu0 0.0
    %324 = vmatpush1.msra.mxu0 0.0
    %325 = vmatprep.subr.mxu0 0.0
    %326 = vmatpush1.msra.mxu0 0.0
    %327 = vmatprep.subr.mxu0 0.0
    %328 = vmatpush1.msra.mxu0 0.0
    %329 = vmatprep.mubr.f32.mxu0 0.0
    %330 = vmatmul.mubr.f32.gmra.mrb[0].mxu0 %v241
    %v331 = vpop.f32.mrb[0].mxu0
    %v332 = vadd.f32 %v263, %v331
    %v333 = vpop.f32.mrb[0].mxu0
    %334 = vdwg.mxu0
    %v335 = vmax.f32 %v332, 0.0
    %v336 = vld [vmem:[#allocation5] sm:$0xff]
    %v337 = vld [vmem:[#allocation5 + $0x8] sm:$0xff]
    %v338 = vld [vmem:[#allocation5 + $0x10] sm:$0xff]
    %v339 = vld [vmem:[#allocation5 + $0x18] sm:$0xff]
    %v340 = vld [vmem:[#allocation5 + $0x20] sm:$0xff]
    %v341 = vld [vmem:[#allocation5 + $0x28] sm:$0xff]
    %v342 = vld [vmem:[#allocation5 + $0x30] sm:$0xff]
    %v343 = vld [vmem:[#allocation5 + $0x38] sm:$0xff]
    %v344 = vld [vmem:[#allocation5 + $0x40] sm:$0xff]
    %v345 = vld [vmem:[#allocation5 + $0x48] sm:$0xff]
    %v346 = vld [vmem:[#allocation5 + $0x50] sm:$0xff]
    %v347 = vld [vmem:[#allocation5 + $0x58] sm:$0xff]
    %v348 = vld [vmem:[#allocation5 + $0x60] sm:$0xff]
    %v349 = vld [vmem:[#allocation5 + $0x68] sm:$0xff]
    %v350 = vld [vmem:[#allocation5 + $0x70] sm:$0xff]
    %v351 = vld [vmem:[#allocation5 + $0x78] sm:$0xff]
    %v352 = vld [vmem:[%s8] sm:$0x1]
    %v354 = vlaneseq
    %v355 = vshrl.u32 %v354, 7
    %v356 = vsub.s32 0, %v355
    %v357 = vrot.slane %v352, %v356
    %359 = vmatprep.subr.mxu0 0.0
    %360 = vmatpush1.msra.mxu0 %v336
    %361 = vmatprep.subr.mxu0 0.0
    %362 = vmatpush1.msra.mxu0 %v337
    %363 = vmatprep.subr.mxu0 0.0
    %364 = vmatpush1.msra.mxu0 %v338
    %365 = vmatprep.subr.mxu0 0.0
    %366 = vmatpush1.msra.mxu0 %v339
    %367 = vmatprep.subr.mxu0 0.0
    %368 = vmatpush1.msra.mxu0 %v340
    %369 = vmatprep.subr.mxu0 0.0
    %370 = vmatpush1.msra.mxu0 %v341
    %371 = vmatprep.subr.mxu0 0.0
    %372 = vmatpush1.msra.mxu0 %v342
    %373 = vmatprep.subr.mxu0 0.0
    %374 = vmatpush1.msra.mxu0 %v343
    %375 = vmatprep.subr.mxu0 0.0
    %376 = vmatpush1.msra.mxu0 %v344
    %377 = vmatprep.subr.mxu0 0.0
    %378 = vmatpush1.msra.mxu0 %v345
    %379 = vmatprep.subr.mxu0 0.0
    %380 = vmatpush1.msra.mxu0 %v346
    %381 = vmatprep.subr.mxu0 0.0
    %382 = vmatpush1.msra.mxu0 %v347
    %383 = vmatprep.subr.mxu0 0.0
    %384 = vmatpush1.msra.mxu0 %v348
    %385 = vmatprep.subr.mxu0 0.0
    %386 = vmatpush1.msra.mxu0 %v349
    %387 = vmatprep.subr.mxu0 0.0
    %388 = vmatpush1.msra.mxu0 %v350
    %389 = vmatprep.subr.mxu0 0.0
    %390 = vmatpush1.msra.mxu0 %v351
    %391 = vmatprep.subr.mxu0 0.0
    %392 = vmatpush1.msra.mxu0 0.0
    %393 = vmatprep.subr.mxu0 0.0
    %394 = vmatpush1.msra.mxu0 0.0
    %395 = vmatprep.subr.mxu0 0.0
    %396 = vmatpush1.msra.mxu0 0.0
    %397 = vmatprep.subr.mxu0 0.0
    %398 = vmatpush1.msra.mxu0 0.0
    %399 = vmatprep.subr.mxu0 0.0
    %400 = vmatpush1.msra.mxu0 0.0
    %401 = vmatprep.subr.mxu0 0.0
    %402 = vmatpush1.msra.mxu0 0.0
    %403 = vmatprep.subr.mxu0 0.0
    %404 = vmatpush1.msra.mxu0 0.0
    %405 = vmatprep.subr.mxu0 0.0
    %406 = vmatpush1.msra.mxu0 0.0
    %407 = vmatprep.subr.mxu0 0.0
    %408 = vmatpush1.msra.mxu0 0.0
    %409 = vmatprep.subr.mxu0 0.0
    %410 = vmatpush1.msra.mxu0 0.0
    %411 = vmatprep.subr.mxu0 0.0
    %412 = vmatpush1.msra.mxu0 0.0
    %413 = vmatprep.subr.mxu0 0.0
    %414 = vmatpush1.msra.mxu0 0.0
    %415 = vmatprep.subr.mxu0 0.0
    %416 = vmatpush1.msra.mxu0 0.0
    %417 = vmatprep.subr.mxu0 0.0
    %418 = vmatpush1.msra.mxu0 0.0
    %419 = vmatprep.subr.mxu0 0.0
    %420 = vmatpush1.msra.mxu0 0.0
    %421 = vmatprep.subr.mxu0 0.0
    %422 = vmatpush1.msra.mxu0 0.0
    %423 = vmatprep.mubr.f32.mxu0 0.0
    %424 = vmatmul.mubr.f32.gmra.mrb[0].mxu0 %v335
    %v425 = vpop.f32.mrb[0].mxu0
    %v426 = vadd.f32 %v357, %v425
    %v427 = vpop.f32.mrb[0].mxu0
    %428 = vdwg.mxu0
    %vm429 = vcmask 64512
    %430 = vst.msk [vmem:[#allocation7] sm:$0xff] %vm429, %v426
    // Predicated region
    $region46: #{_lambda_.1} parent=1 // pred_check
      _
    $region47: #{_lambda_.1} parent=1 // pred_check_branch
      %432 = sbr.rel (0) target = $region49
    $region48: #{_lambda_.1} parent=1 // pred_region
      %s434 = ssub.s32 128, 32
      %435 = vsyncadd [#allocation4], %s434
      %s436 = sshll.u32 [#allocation7], 4
      %s437 = int_to_ptr.vmem [resolvable:$true] %s436
      %442 = dma.vmem_to_hbm [thread:$0]  %s437, 32, %s9, [#allocation4], 32, 32, 2
    $region49: #{_lambda_.1} parent=1 // pred_fallthru
      _
    // Predicated region
    $region50: #{_lambda_.1} parent=1 // pred_check
      _
    $region51: #{_lambda_.1} parent=1 // pred_check_branch
      %444 = sbr.rel (0) target = $region53
    $region52: #{_lambda_.1} parent=1 // pred_region
      %445 = dma.done [#allocation4], 128
    $region53: #{_lambda_.1} parent=1 // pred_fallthru
      _
    %446 = vsyncpa [#allocation3], 1
    %447 = vsyncpa [#allocation6], 1
    %448 = vsyncpa [#allocation4], 1

</llo_original>
